<compile_context>
chip_gen: v6e
topology: v6e:2x2x1
jax: 0.10.0
libtpu: 0.0.40
codegen_flags: <defaults>
</compile_context>

<pallas_src>
import jax
import jax.numpy as jnp
from jax import lax
from jax.experimental import pallas as pl
from jax.experimental.pallas import tpu as pltpu


# ----------------------------- Pass 1: GroupNorm statistics -----------------

def _gn_stats_kernel(x_ref, out_ref):
    # x_ref:   (C_in, T_tile) one (batch, T-tile) block
    # out_ref: (C_in, 2)      accumulated [sum, sum_sq] per channel (f32)
    @pl.when(pl.program_id(1) == 0)
    def _():
        out_ref[...] = jnp.zeros_like(out_ref)

    xf = x_ref[...].astype(jnp.float32)
    s = jnp.sum(xf, axis=1, keepdims=True)         # (C_in, 1)
    sq = jnp.sum(xf * xf, axis=1, keepdims=True)   # (C_in, 1)
    out_ref[...] += jnp.concatenate([s, sq], axis=1)


# -------------------- Pass 2: folded FMA + SiLU + fused "same" Conv1d -------

def _conv_kernel(x_ref, halo_ref, g_ref, b_ref, wf_ref, cb_ref, out_ref):
    # x_ref:    (C_in, T_tile)   raw input tile (input dtype)
    # halo_ref: (C_in, 2)        raw neighbor columns [left, right] (input dtype)
    # g_ref:    (C_in, 1)        folded per-(batch, channel) scale (f32)
    # b_ref:    (C_in, 1)        folded per-(batch, channel) shift (f32)
    # wf_ref:   (C_out, 3*C_in)  fused conv weight [W_k0 | W_k1 | W_k2]
    # cb_ref:   (C_out, 1)       conv bias (f32)
    # out_ref:  (C_out, T_tile)
    c_in, tt = x_ref.shape
    j = pl.program_id(1)
    nt = pl.num_programs(1)

    g = g_ref[...]
    b = b_ref[...]

    # Folded GroupNorm-affine o FiLM: one FMA per element, then SiLU (EUP).
    z = x_ref[...].astype(jnp.float32) * g + b
    act = z * jax.nn.sigmoid(z)                                  # (C_in, Tt) f32

    # Halo columns get the identical per-channel FMA + SiLU; zero them at the
    # global sequence edges (PyTorch zero-pads the *activation* input).
    hz = halo_ref[...].astype(jnp.float32) * g + b
    hact = hz * jax.nn.sigmoid(hz)                               # (C_in, 2)
    left = jnp.where(j > 0, hact[:, 0:1], 0.0)                   # act[:, -1]
    right = jnp.where(j < nt - 1, hact[:, 1:2], 0.0)             # act[:, Tt]

    # Lane-shifted taps (XLU rolls) with single-column boundary patches.
    lane = lax.broadcasted_iota(jnp.int32, (c_in, tt), 1)
    a_prev = jnp.where(lane == 0, left, pltpu.roll(act, 1, axis=1))       # t-1
    a_next = jnp.where(lane == tt - 1, right, pltpu.roll(act, tt - 1, axis=1))  # t+1

    # Single fused MXU matmul over contraction depth 3*C_in (bf16 operands,
    # f32 accumulation), bias added once afterwards.
    stacked = jnp.concatenate([a_prev, act, a_next], axis=0).astype(wf_ref.dtype)
    y = jnp.dot(wf_ref[...], stacked, preferred_element_type=jnp.float32)
    y = y + cb_ref[...]
    out_ref[...] = y.astype(out_ref.dtype)


# --------------------------------- Wrapper ----------------------------------

def _pick_t_tile(t, requested, max_tile=1024):
    if requested is not None:
        assert t % requested == 0 and (requested % 128 == 0 or requested == t)
        return requested
    if t % 128 != 0:
        return t            # single full-width block (equals full array dim)
    best, cand = 128, 128
    while cand <= min(t, max_tile):
        if t % cand == 0:
            best = cand
        cand += 128
    return best


def conv_block_1d(x, gn_weight, gn_bias, conv_weight, conv_bias,
                  scale_shift=None, *, num_groups=8, eps=1e-5,
                  stride=1, padding=1, dilation=1, use_norm=True,
                  t_tile=None, matmul_dtype=jnp.bfloat16):
    """ConvBlock1d forward.

    x:           (B, C_in, T)
    gn_weight:   (C_in,)   GroupNorm gamma
    gn_bias:     (C_in,)   GroupNorm beta
    conv_weight: (C_out, C_in, 3)
    conv_bias:   (C_out,)
    scale_shift: optional (scale, shift), each broadcastable to (B, C_in, 1)
    returns:     (B, C_out, T) in x.dtype
    """
    b, c_in, t = x.shape
    c_out, c_in_w, k_size = conv_weight.shape
    assert c_in_w == c_in, "conv_weight in_channels mismatch"
    # TODO(synk): only the module-default config (kernel_size=3, stride=1,
    # padding=1, dilation=1) is implemented; other configs need a different
    # halo width and strided output indexing.
    assert k_size == 3 and stride == 1 and padding == 1 and dilation == 1
    if use_norm:
        assert c_in % num_groups == 0, "num_groups must divide in_channels"

    tt = _pick_t_tile(t, t_tile)
    nt = t // tt

    gamma = gn_weight.astype(jnp.float32).reshape(1, c_in)
    beta = gn_bias.astype(jnp.float32).reshape(1, c_in)

    # ---- Pass 1: per-(batch, channel) [sum, sum_sq]; fold into FMA coeffs ---
    if use_norm:
        stats = pl.pallas_call(
            _gn_stats_kernel,
            out_shape=jax.ShapeDtypeStruct((b, c_in, 2), jnp.float32),
            grid=(b, nt),
            in_specs=[pl.BlockSpec((None, c_in, tt), lambda i, j: (i, 0, j))],
            out_specs=pl.BlockSpec((None, c_in, 2), lambda i, j: (i, 0, 0)),
            compiler_params=pltpu.CompilerParams(
                dimension_semantics=("parallel", "arbitrary")),
        )(x)
        cpg = c_in // num_groups
        n = float(cpg * t)
        s_g = stats[..., 0].reshape(b, num_groups, cpg).sum(axis=2)   # (B, G)
        sq_g = stats[..., 1].reshape(b, num_groups, cpg).sum(axis=2)
        mean_g = s_g / n
        # TODO(synk): E[x^2]-mean^2 can cancel for data with |mean| >> std; a
        # centered second pass would be needed for full robustness.
        var_g = jnp.maximum(sq_g / n - mean_g * mean_g, 0.0)
        rstd_g = lax.rsqrt(var_g + eps)
        mean_c = jnp.repeat(mean_g, cpg, axis=1)                      # (B, C_in)
        rstd_c = jnp.repeat(rstd_g, cpg, axis=1)
        eff_g = gamma * rstd_c
        eff_b = beta - gamma * mean_c * rstd_c
    else:
        eff_g = jnp.ones((b, c_in), jnp.float32)
        eff_b = jnp.zeros((b, c_in), jnp.float32)

    if scale_shift is not None:
        scale, shift = scale_shift
        scale = jnp.asarray(scale, jnp.float32).reshape(b, c_in)
        shift = jnp.asarray(shift, jnp.float32).reshape(b, c_in)
        eff_g = eff_g * (scale + 1.0)
        eff_b = eff_b * (scale + 1.0) + shift

    eff_g = eff_g.reshape(b, c_in, 1)
    eff_b = eff_b.reshape(b, c_in, 1)

    # ---- Halo columns per T tile (raw x; activated inside the kernel) ------
    xt = x.reshape(b, c_in, nt, tt)
    zero_col = jnp.zeros((b, c_in, 1, 1), x.dtype)
    halo_l = jnp.concatenate([zero_col, xt[:, :, :-1, -1:]], axis=2)  # (b,c,nt,1)
    halo_r = jnp.concatenate([xt[:, :, 1:, 0:1], zero_col], axis=2)   # (b,c,nt,1)
    halo = jnp.transpose(jnp.concatenate([halo_l, halo_r], axis=3),
                         (0, 2, 1, 3))                                # (b,nt,c,2)

    # ---- Fused conv weight: (C_out, K*C_in), row block k holds W[:, :, k] ---
    wf = jnp.transpose(conv_weight, (0, 2, 1)).reshape(c_out, k_size * c_in)
    wf = wf.astype(matmul_dtype)
    cb = conv_bias.astype(jnp.float32).reshape(c_out, 1)

    # ---- Pass 2: FMA + SiLU + fused conv, tiled over (B, T) ----------------
    return pl.pallas_call(
        _conv_kernel,
        out_shape=jax.ShapeDtypeStruct((b, c_out, t), x.dtype),
        grid=(b, nt),
        in_specs=[
            pl.BlockSpec((None, c_in, tt), lambda i, j: (i, 0, j)),         # x
            pl.BlockSpec((None, None, c_in, 2), lambda i, j: (i, j, 0, 0)),  # halo
            pl.BlockSpec((None, c_in, 1), lambda i, j: (i, 0, 0)),          # eff_g
            pl.BlockSpec((None, c_in, 1), lambda i, j: (i, 0, 0)),          # eff_b
            pl.BlockSpec((c_out, k_size * c_in), lambda i, j: (0, 0)),      # wf
            pl.BlockSpec((c_out, 1), lambda i, j: (0, 0)),                  # bias
        ],
        out_specs=pl.BlockSpec((None, c_out, tt), lambda i, j: (i, 0, j)),
        compiler_params=pltpu.CompilerParams(
            dimension_semantics=("parallel", "parallel")),
    )(x, halo, eff_g, eff_b, wf, cb)


# --------------------------------- Reference ---------------------------------

def _reference(x, gn_w, gn_b, conv_w, conv_b, scale_shift, num_groups, eps,
               use_norm=True, conv_dtype=jnp.float32):
    b, c, t = x.shape
    xf = x.astype(jnp.float32)
    if use_norm:
        g = num_groups
        xg = xf.reshape(b, g, c // g, t)
        mean = jnp.mean(xg, axis=(2, 3), keepdims=True)
        var = jnp.mean((xg - mean) ** 2, axis=(2, 3), keepdims=True)
        xn = ((xg - mean) / jnp.sqrt(var + eps)).reshape(b, c, t)
        xn = xn * gn_w[None, :, None] + gn_b[None, :, None]
    else:
        xn = xf
    if scale_shift is not None:
        scale, shift = scale_shift
        xn = xn * (scale + 1.0) + shift
    act = xn * jax.nn.sigmoid(xn)
    y = lax.conv_general_dilated(
        act.astype(conv_dtype), conv_w.astype(conv_dtype),
        window_strides=(1,), padding=((1, 1),),
        dimension_numbers=("NCH", "OIH", "NCH"),
        preferred_element_type=jnp.float32)
    return y + conv_b[None, :, None]


if __name__ == "__main__":
    key = jax.random.PRNGKey(0)
    kx, kg, kb, kw, kcb, ks, ksh = jax.random.split(key, 7)

    B, C_IN, C_OUT, T, G = 2, 16, 32, 256, 8

    x = jax.random.normal(kx, (B, C_IN, T), dtype=jnp.float32)
    gn_w = jax.random.normal(kg, (C_IN,), dtype=jnp.float32)
    gn_b = jax.random.normal(kb, (C_IN,), dtype=jnp.float32)
    conv_w = jax.random.normal(kw, (C_OUT, C_IN, 3), dtype=jnp.float32) * 0.1
    conv_b = jax.random.normal(kcb, (C_OUT,), dtype=jnp.float32) * 0.1
    scale = jax.random.normal(ks, (B, C_IN, 1), dtype=jnp.float32) * 0.1
    shift = jax.random.normal(ksh, (B, C_IN, 1), dtype=jnp.float32) * 0.1

    def check(out, ref, tol, name):
        assert out.shape == ref.shape, (name, out.shape, ref.shape)
        err = float(jnp.max(jnp.abs(out - ref)))
        assert jnp.allclose(out, ref, atol=tol, rtol=tol), (name, err)

    # 1) FiLM conditioning, f32 matmul path, T tiled (2 tiles -> halo path).
    out = conv_block_1d(x, gn_w, gn_b, conv_w, conv_b,
                        scale_shift=(scale, shift), num_groups=G,
                        t_tile=128, matmul_dtype=jnp.float32)
    out = jax.block_until_ready(out)
    ref = _reference(x, gn_w, gn_b, conv_w, conv_b, (scale, shift), G, 1e-5)
    check(out, ref, 2e-4, "f32+film+tiled")

    # 2) FiLM conditioning, default bf16 matmul path (vs bf16-conv reference).
    out = conv_block_1d(x, gn_w, gn_b, conv_w, conv_b,
                        scale_shift=(scale, shift), num_groups=G, t_tile=128)
    out = jax.block_until_ready(out)
    ref = _reference(x, gn_w, gn_b, conv_w, conv_b, (scale, shift), G, 1e-5,
                     conv_dtype=jnp.bfloat16)
    check(out, ref, 1e-2, "bf16+film+tiled")

    # 3) No FiLM, bf16, auto tile (single tile -> both global edges masked).
    out = conv_block_1d(x, gn_w, gn_b, conv_w, conv_b, num_groups=G)
    out = jax.block_until_ready(out)
    ref = _reference(x, gn_w, gn_b, conv_w, conv_b, None, G, 1e-5,
                     conv_dtype=jnp.bfloat16)
    check(out, ref, 1e-2, "bf16")

    # 4) use_norm=False path (stats pass skipped), f32 matmul.
    out = conv_block_1d(x, gn_w, gn_b, conv_w, conv_b, num_groups=G,
                        use_norm=False, t_tile=128, matmul_dtype=jnp.float32)
    out = jax.block_until_ready(out)
    ref = _reference(x, gn_w, gn_b, conv_w, conv_b, None, G, 1e-5,
                     use_norm=False)
    check(out, ref, 2e-4, "f32+nonorm")

    print("KERNEL_OK")
</pallas_src>

<mosaic_0001>
module attributes {stable_mosaic.version = 11 : i64} {
  func.func @_gn_stats_kernel(%arg0: i32, %arg1: i32, %arg2: memref<1x16x128xf32, #tpu.memory_space<vmem>>, %arg3: memref<1x16x2xf32, #tpu.memory_space<vmem>>) attributes {dimension_semantics = [#tpu.dimension_semantics<parallel>, #tpu.dimension_semantics<arbitrary>], iteration_bounds = array<i64: 2, 2>, scalar_prefetch = 0 : i64, scratch_operands = 0 : i64, tpu.core_type = #tpu.core_type<tc>, window_params = [{transform_indices = @transform_0, window_bounds = array<i64: 1, 16, 128>}, {transform_indices = @transform_1, window_bounds = array<i64: 1, 16, 2>}]} {
    %c0_i32 = arith.constant 0 : i32
    %0 = arith.cmpi eq, %arg1, %c0_i32 : i32
    %1 = arith.extui %0 : i1 to i32
    %c0_i32_0 = arith.constant 0 : i32
    %2 = arith.cmpi ne, %1, %c0_i32_0 : i32
    scf.if %2 {
      %cst_10 = arith.constant 0.000000e+00 : f32
      %17 = vector.broadcast %cst_10 : f32 to vector<16x2xf32>
      %c0_11 = arith.constant 0 : index
      %c0_12 = arith.constant 0 : index
      %c0_13 = arith.constant 0 : index
      %18 = vector.load %arg3[%c0_11, %c0_12, %c0_13] : memref<1x16x2xf32, #tpu.memory_space<vmem>>, vector<1x16x2xf32>
      %19 = vector.shape_cast %18 : vector<1x16x2xf32> to vector<16x2xf32>
      %20 = vector.shape_cast %17 : vector<16x2xf32> to vector<1x16x2xf32>
      tpu.vector_store %arg3[%c0_11, %c0_12, %c0_13], %20 {strides = array<i32>} : memref<1x16x2xf32, #tpu.memory_space<vmem>>, vector<1x16x2xf32>,
    } else {
    }
    %c0 = arith.constant 0 : index
    %c0_1 = arith.constant 0 : index
    %c0_2 = arith.constant 0 : index
    %3 = vector.load %arg2[%c0, %c0_1, %c0_2] : memref<1x16x128xf32, #tpu.memory_space<vmem>>, vector<1x16x128xf32>
    %4 = vector.shape_cast %3 : vector<1x16x128xf32> to vector<16x128xf32>
    %cst = arith.constant dense<0.000000e+00> : vector<16xf32>
    %5 = vector.multi_reduction <add>, %4, %cst [1] : vector<16x128xf32> to vector<16xf32>
    %6 = vector.shape_cast %5 : vector<16xf32> to vector<16x1xf32>
    %7 = arith.mulf %4, %4 : vector<16x128xf32>
    %cst_3 = arith.constant dense<0.000000e+00> : vector<16xf32>
    %8 = vector.multi_reduction <add>, %7, %cst_3 [1] : vector<16x128xf32> to vector<16xf32>
    %9 = vector.shape_cast %8 : vector<16xf32> to vector<16x1xf32>
    %c0_4 = arith.constant 0 : index
    %c0_5 = arith.constant 0 : index
    %c0_6 = arith.constant 0 : index
    %10 = vector.load %arg3[%c0_4, %c0_5, %c0_6] : memref<1x16x2xf32, #tpu.memory_space<vmem>>, vector<1x16x2xf32>
    %11 = vector.shape_cast %10 : vector<1x16x2xf32> to vector<16x2xf32>
    %12 = tpu.concatenate %6, %9 in 1 : vector<16x1xf32>, vector<16x1xf32> -> vector<16x2xf32>
    %13 = arith.addf %11, %12 : vector<16x2xf32>
    %c0_7 = arith.constant 0 : index
    %c0_8 = arith.constant 0 : index
    %c0_9 = arith.constant 0 : index
    %14 = vector.load %arg3[%c0_7, %c0_8, %c0_9] : memref<1x16x2xf32, #tpu.memory_space<vmem>>, vector<1x16x2xf32>
    %15 = vector.shape_cast %14 : vector<1x16x2xf32> to vector<16x2xf32>
    %16 = vector.shape_cast %13 : vector<16x2xf32> to vector<1x16x2xf32>
    tpu.vector_store %arg3[%c0_7, %c0_8, %c0_9], %16 {strides = array<i32>} : memref<1x16x2xf32, #tpu.memory_space<vmem>>, vector<1x16x2xf32>,
    return
  }
  func.func @transform_0(%arg0: i32, %arg1: i32) -> (i32, i32, i32) {
    %c0_i32 = arith.constant 0 : i32
    %c0_i32_0 = arith.constant 0 : i32
    return %arg0, %c0_i32, %arg1 : i32, i32, i32
  }
  func.func @transform_1(%arg0: i32, %arg1: i32) -> (i32, i32, i32) {
    %c0_i32 = arith.constant 0 : i32
    %c0_i32_0 = arith.constant 0 : i32
    %c0_i32_1 = arith.constant 0 : i32
    return %arg0, %c0_i32, %c0_i32_0 : i32, i32, i32
  }
}

</mosaic_0001>

<llo_original>
// kernel: tpu_custom_call.1
$region0: #{tpu_custom_call.1}
  #allocation0 [shape = 'u32[]', space=smem, size = 0x4, offset = 0x4, fixed_abs, tag = 'smem constant byte address 0x4 - core index']
  #allocation1 [shape = 'u32[144,128]{1,0:T(1,128)}', space=vmem, size = 0x12000, scoped, tag = 'internal scratch']
  %s0 = inlined_call_operand.hbm [shape: f32[2,16,256], index: 0, kind: input, shape index: {}]
  %s1 = inlined_call_operand.vmem [shape: f32[2,16,2], index: 1, kind: output, shape index: {}]
  %s2 = sld [smem:[#allocation0]]
  $region45: #{tpu_custom_call.1} parent=0
    _
  %s4 = ssub.s32 1, %s2
  %s5 = scalar_select 0, %s4, %s2
  $region1: #{tpu_custom_call.1} parent=0
    #allocation2 [shape = 'u8[16384]{0}', space=vmem, size = 0x4000, scoped, tag = 'input window, operand 0']
    #allocation3 [shape = 's32[2]{0}', space=sflag, size = 0x8, scoped, tag = 'scoped memory for tpu_custom_call.1']
    %6 = vsyncpa [#allocation3], 0
    %s7 = scalar_lea.sflag [#allocation3], 1
    %8 = vsyncpa %s7, 0
    loop: start=0, step=1, limit=6
    $region2: #{tpu_custom_call.1} parent=1 // loop_pre_header
      _
    $region3: #{tpu_custom_call.1} parent=1 // loop_header
      %s10 = sphi 0, %s14
      %p11 = scmp.ge.s32.totalorder %s10, 6
      %s17 = sphi 0, %s29
      %s18 = sphi 0, %s25
      %s19 = sphi 0, %s17
      %s20 = sphi 0, %s18
      %s21 = sphi 0, %s19
      %s22 = sphi 0, %s20
      %s34 = sphi 0, %s36
      %s37 = sphi 0, %s34
      %s38 = sphi 0, %s37
      %s54 = sphi 0, %s38
      %s60 = sphi 0, %s62
      %s63 = sphi 0, %s60
      %s64 = sphi 0, %s63
      %s80 = sphi 0, %s64
    $region4: #{tpu_custom_call.1} parent=1 // loop_header_branch
      %13 = sbr.rel (%p11) target = $region8
    $region5: #{tpu_custom_call.1} parent=1 // loop_body
      %s15 = ssub.s32 %s10, 1
      %s16 = ssub.s32 %s10, 2
      %s23 = sadd.s32 1, %s18
      %p24 = scmp.ge.s32.totalorder %s23, 2
      %s25 = scalar_select %p24, 0, %s23
      %s26 = sadd.s32 1, %s17
      %s27 = scalar_select %p24, %s26, %s17
      %p28 = scmp.ge.s32.totalorder %s27, 2
      %s29 = scalar_select %p28, 0, %s27
      %s30 = ssub.s32 %s17, %s29
      %s31 = ssub.s32 %s18, %s25
      %s32 = sor.u32 %s30, %s31
      %p33 = scmp.eq.s32.totalorder %s32, 0
      %s35 = sadd.s32 %s34, 1
      %s36 = scalar_select %p33, %s34, %s35
      %p39 = pneg %p33
      %p40 = scmp.eq.s32.totalorder %s10, 3
      %p41 = por %p39, %p40
      %p42 = scmp.ne.s32.totalorder %s34, %s37
      %p43 = scmp.eq.s32.totalorder %s10, 0
      %p44 = por %p42, %p43
      %p45 = scmp.ne.s32.totalorder %s34, %s37
      %p46 = scmp.eq.s32.totalorder %s15, 3
      %p47 = por %p45, %p46
      %p48 = scmp.ne.s32.totalorder %s37, %s38
      %p49 = scmp.eq.s32.totalorder %s15, 0
      %p50 = por %p48, %p49
      %p51 = scmp.ne.s32.totalorder %s37, %s38
      %p52 = scmp.eq.s32.totalorder %s16, 3
      %p53 = por %p51, %p52
      %p55 = scmp.ne.s32.totalorder %s38, %s54
      %p56 = scmp.eq.s32.totalorder %s16, 0
      %p57 = por %p55, %p56
      %s58 = ssub.s32 %s17, %s29
      %p59 = scmp.eq.s32.totalorder %s58, 0
      %s61 = sadd.s32 %s60, 1
      %s62 = scalar_select %p59, %s60, %s61
      %p65 = pneg %p59
      %p66 = scmp.eq.s32.totalorder %s10, 3
      %p67 = por %p65, %p66
      %p68 = scmp.ne.s32.totalorder %s60, %s63
      %p69 = scmp.eq.s32.totalorder %s10, 0
      %p70 = por %p68, %p69
      %p71 = scmp.ne.s32.totalorder %s60, %s63
      %p72 = scmp.eq.s32.totalorder %s15, 3
      %p73 = por %p71, %p72
      %p74 = scmp.ne.s32.totalorder %s63, %s64
      %p75 = scmp.eq.s32.totalorder %s15, 0
      %p76 = por %p74, %p75
      %p77 = scmp.ne.s32.totalorder %s63, %s64
      %p78 = scmp.eq.s32.totalorder %s16, 3
      %p79 = por %p77, %p78
      %p81 = scmp.ne.s32.totalorder %s64, %s80
      %p82 = scmp.eq.s32.totalorder %s16, 0
      %p83 = por %p81, %p82
      %p84 = scmp.le.s32.totalorder 1, %s10
      %p85 = scmp.lt.s32.totalorder %s10, 5
      %p86 = pnand %p84, %p85
      %p87 = pneg %p86
      // Predicated region
      $region9: #{tpu_custom_call.1} parent=5 // pred_check
        _
      $region10: #{tpu_custom_call.1} parent=5 // pred_check_branch
        %89 = sbr.rel (%p86) target = $region12
      $region11: #{tpu_custom_call.1} parent=5 // pred_region
        %s90 = ssub.s32 %s10, 1
      $region12: #{tpu_custom_call.1} parent=5 // pred_fallthru
        _
      %p91 = scmp.lt.s32.totalorder %s10, 4
      // Predicated region
      $region13: #{tpu_custom_call.1} parent=5 // pred_check
        %p92 = pneg %p91
      $region14: #{tpu_custom_call.1} parent=5 // pred_check_branch
        %94 = sbr.rel (%p92) target = $region16
      $region15: #{tpu_custom_call.1} parent=5 // pred_region
        // Predicated region
        $region17: #{tpu_custom_call.1} parent=15 // pred_check
          %p95 = pneg %p44
        $region18: #{tpu_custom_call.1} parent=15 // pred_check_branch
          %97 = sbr.rel (%p95) target = $region20
        $region19: #{tpu_custom_call.1} parent=15 // pred_region
          %s98 = sand.u32 %s34, 1
          %s99 = scalar_lea.sflag [#allocation3], %s98
          %s100 = sand.u32 %s34, 1
          %s101 = smul.addr %s100, 16
          %s102 = scalar_lea.vmem [#allocation2], %s101
          %s104 = ssub.s32 256, 256
          %105 = vsyncadd %s99, %s104
          %s106 = smul.addr %s17, 4
          %s107 = sadd.s32 %s18, %s106
          %s108 = smul.addr %s107, 128
          %s109 = scalar_lea.hbm %s0, %s108
          %s110 = sshll.u32 %s102, 4
          %s111 = int_to_ptr.vmem [resolvable:$true] %s110
          %116 = dma.hbm_to_vmem [thread:$0]  %s109, 256, %s111, %s99, 256, 128, 8
        $region20: #{tpu_custom_call.1} parent=15 // pred_fallthru
          _
      $region16: #{tpu_custom_call.1} parent=5 // pred_fallthru
        _
      %p117 = scmp.le.s32.totalorder 1, %s10
      %p118 = scmp.lt.s32.totalorder %s10, 5
      %p119 = pnand %p117, %p118
      %p120 = pneg %p119
      // Predicated region
      $region21: #{tpu_custom_call.1} parent=5 // pred_check
        _
      $region22: #{tpu_custom_call.1} parent=5 // pred_check_branch
        %122 = sbr.rel (%p119) target = $region24
      $region23: #{tpu_custom_call.1} parent=5 // pred_region
        %s123 = ssub.s32 %s10, 1
        %s124 = sand.u32 %s37, 1
        %s125 = scalar_lea.sflag [#allocation3], %s124
        %s126 = sand.u32 %s37, 1
        %s127 = smul.addr %s126, 16
        %s128 = scalar_lea.vmem [#allocation2], %s127
        // Predicated region
        $region25: #{tpu_custom_call.1} parent=23 // pred_check
          %p129 = pneg %p50
        $region26: #{tpu_custom_call.1} parent=23 // pred_check_branch
          %131 = sbr.rel (%p129) target = $region28
        $region27: #{tpu_custom_call.1} parent=23 // pred_region
          %132 = dma.done %s125, 256
        $region28: #{tpu_custom_call.1} parent=23 // pred_fallthru
          _
        %s133 = sand.u32 %s37, 1
        %s134 = scalar_lea.sflag [#allocation3], %s133
        %s135 = sand.u32 %s37, 1
        %s136 = smul.addr %s135, 16
        %s137 = scalar_lea.vmem [#allocation2], %s136
        %p138 = pneg %p50
        %p139 = pneg %p47
        %p140 = pneg %p76
        %p141 = pneg %p73
        %p142 = scmp.lt.s32.totalorder %s19, 1
        %s143 = scalar_select %p142, %s19, 1
        %s144 = smul.addr %s143, 2
        %s145 = smul.addr %s144, 8
        %s146 = scalar_lea.vmem %s1, %s145
        %p147 = scmp.lt.s32.totalorder %s19, 1
        %s148 = scalar_select %p147, %s19, 1
        %s149 = smul.addr %s148, 2
        %s150 = smul.addr %s149, 8
        %s151 = scalar_lea.vmem %s1, %s150
        %p152 = scmp.eq.s32.totalorder %s20, 0
        // Predicated region
        $region29: #{tpu_custom_call.1} parent=23 // pred_check
          %p153 = pneg %p152
        $region30: #{tpu_custom_call.1} parent=23 // pred_check_branch
          %155 = sbr.rel (%p153) target = $region32
        $region31: #{tpu_custom_call.1} parent=23 // pred_region
          %vm156 = vcmask 15360
          %157 = vst.msk [vmem:[%s151] sm:$0xff] %vm156, 0.0
          %158 = vst.msk [vmem:[%s151 + $0x8] sm:$0xff] %vm156, 0.0
        $region32: #{tpu_custom_call.1} parent=23 // pred_fallthru
          _
        %v159 = vld [vmem:[%s128] sm:$0xff]
        %v160 = vld [vmem:[%s128 + $0x8] sm:$0xff]
        %161 = vadd.xlane.f32.xlu0 %v159
        %v162 = vpop.xlane.xlu0 %161
        %163 = vadd.xlane.f32.xlu0 %v160
        %v164 = vpop.xlane.xlu0 %163
        %v165 = vmul.f32 %v159, %v159
        %v166 = vmul.f32 %v160, %v160
        %167 = vadd.xlane.f32.xlu0 %v165
        %v168 = vpop.xlane.xlu0 %167
        %169 = vadd.xlane.f32.xlu0 %v166
        %v170 = vpop.xlane.xlu0 %169
        %v171 = vld [vmem:[%s151] sm:$0xff]
        %v172 = vld [vmem:[%s151 + $0x8] sm:$0xff]
        %vm173 = vcmask 7168
        %v174 = vsel %vm173, %v162, %v168
        %v175 = vsel %vm173, %v164, %v170
        %v176 = vadd.f32 %v171, %v174
        %v177 = vadd.f32 %v172, %v175
        %vm178 = vcmask 15360
        %179 = vst.msk [vmem:[%s151] sm:$0xff] %vm178, %v176
        %180 = vst.msk [vmem:[%s151 + $0x8] sm:$0xff] %vm178, %v177
        %p181 = scmp.lt.s32.totalorder %s19, 1
        %s182 = scalar_select %p181, %s19, 1
        %s183 = smul.addr %s182, 2
        %s184 = smul.addr %s183, 8
        %s185 = scalar_lea.vmem %s1, %s184
        // Predicated region
        $region33: #{tpu_custom_call.1} parent=23 // pred_check
          %p186 = pneg %p73
        $region34: #{tpu_custom_call.1} parent=23 // pred_check_branch
          %188 = sbr.rel (%p186) target = $region36
        $region35: #{tpu_custom_call.1} parent=23 // pred_region
          _
        $region36: #{tpu_custom_call.1} parent=23 // pred_fallthru
          _
      $region24: #{tpu_custom_call.1} parent=5 // pred_fallthru
        _
      %p189 = scmp.le.s32.totalorder 2, %s10
      // Predicated region
      $region37: #{tpu_custom_call.1} parent=5 // pred_check
        %p190 = pneg %p189
      $region38: #{tpu_custom_call.1} parent=5 // pred_check_branch
        %192 = sbr.rel (%p190) target = $region40
      $region39: #{tpu_custom_call.1} parent=5 // pred_region
        %s193 = ssub.s32 %s10, 2
        // Predicated region
        $region41: #{tpu_custom_call.1} parent=39 // pred_check
          %p194 = pneg %p79
        $region42: #{tpu_custom_call.1} parent=39 // pred_check_branch
          %196 = sbr.rel (%p194) target = $region44
        $region43: #{tpu_custom_call.1} parent=39 // pred_region
          %p197 = scmp.lt.s32.totalorder %s21, 1
          %s198 = scalar_select %p197, %s21, 1
          %s199 = smul.addr %s198, 2
          %s200 = smul.addr %s199, 8
          %s201 = scalar_lea.vmem %s1, %s200
        $region44: #{tpu_custom_call.1} parent=39 // pred_fallthru
          _
      $region40: #{tpu_custom_call.1} parent=5 // pred_fallthru
        _
    $region6: #{tpu_custom_call.1} parent=1 // loop_footer
      %s14 = sadd.s32 1, %s10
    $region7: #{tpu_custom_call.1} parent=1 // loop_footer_branch
      %9 = sbr.rel target = $region3
    $region8: #{tpu_custom_call.1} parent=1 // loop_exit
      _
    %202 = vsyncpa [#allocation3], 1
    %s203 = scalar_lea.sflag [#allocation3], 1
    %204 = vsyncpa %s203, 1

</llo_original>
